<compile_context>
chip_gen: v7x
topology: tpu7x:2x2x1
jax: 0.10.0
libtpu: 0.0.40
codegen_flags: <defaults>
</compile_context>

<pallas_src>
import functools

import jax
import jax.numpy as jnp
from jax import lax
from jax.experimental import pallas as pl
from jax.experimental.pallas import tpu as pltpu

LN_EPS = 1e-12
_LANE = 128
_TM_CANDIDATES = (1024, 512, 256, 128, 64, 32, 16, 8)


def _round_up(x, m):
    return ((x + m - 1) // m) * m


def _min_token_tile(dtype):
    """Dtype-aware sublane floor for the token tile: (8,128) f32, (16,128) bf16,
    (32,128) for 8-bit types."""
    itemsize = jnp.dtype(dtype).itemsize
    if itemsize >= 4:
        return 8
    if itemsize == 2:
        return 16
    return 32


@functools.lru_cache(maxsize=None)
def _vmem_params():
    """(tile-picker budget, scoped vmem_limit_bytes) derived from the chip."""
    cap = 64 * 1024 * 1024  # conservative fallback == v7x physical VMEM
    try:
        info = pltpu.get_tpu_info()
        cap = int(getattr(info, "vmem_capacity_bytes", cap)) or cap
    except Exception:  # not on TPU / query unavailable: keep conservative cap
        pass
    budget = (cap * 5) // 8   # ~80 MiB on 128 MiB chips, ~40 MiB on v7x
    limit = (cap * 3) // 4    # ~96 MiB on 128 MiB chips, ~48 MiB on v7x
    return budget, limit


def _pick_tm(n_tok, c1, c2_pad, x_bytes, w_bytes, o_bytes, min_tile, budget):
    """Largest token tile whose *full* footprint (double-buffered x/out tiles,
    double-buffered resident weight/params, and the live f32 intermediates of
    the kernel body) fits the per-generation VMEM budget, preferring tiles that
    keep the grid length >= 4 (so both v7x cores get >= 2 steps each)."""
    # Weight + 4 param rows; the default pipeliner double-buffers them even
    # though their index_map is constant.
    resident = 2 * (c1 * c2_pad * w_bytes + 4 * c2_pad * 4)
    best_fit = None
    for cand in _TM_CANDIDATES:
        if cand < min_tile:
            continue
        tile = (2 * cand * c1 * x_bytes          # x tile, double-buffered
                + 2 * cand * c2_pad * o_bytes    # out tile, double-buffered
                + 4 * cand * c2_pad * 4)         # ~4 live (TM, C2p) f32 slabs in the body
        if tile + resident > budget:
            continue
        if best_fit is None:
            best_fit = cand
        if n_tok >= 4 * cand:
            return cand
    if best_fit is not None:
        # Small token counts: one (or a few) blocks, no bigger than needed.
        return max(min_tile, min(best_fit, _round_up(n_tok, min_tile)))
    # Weight alone blows the budget.  TODO(synk): switch to a K-tiled grid with
    # an accumulator scratch here instead of collapsing the token tile.
    return min_tile


def _feature_resizer_kernel(x_ref, w_ref, b_ref, g_ref, beta_ref, o_ref, *,
                            c2_real, ln_eps):
    # x_ref:    (TM, C1)     input token tile (native dtype)
    # w_ref:    (C1, C2p)    fc weight, [in, out], zero-padded to a lane multiple
    # b_ref:    (1,  C2p)    fc bias,   f32, zero in padded cols
    # g_ref:    (1,  C2p)    LN gamma,  f32, zero in padded cols
    # beta_ref: (1,  C2p)    LN beta,   f32, zero in padded cols
    # o_ref:    (TM, C2p)    output tile
    #
    # MXU matmul at native operand dtype (bf16 path stays bf16; f32 operands are
    # demoted to bf16 by the default precision, same as the reference), f32 acc.
    y = jnp.dot(x_ref[...], w_ref[...], preferred_element_type=jnp.float32)
    y = y + b_ref[...]

    # Single-pass LayerNorm statistics.  Padded weight/bias columns are exactly
    # zero, so y is zero there and the sums over the lane-padded width equal the
    # sums over the real C2 columns — no mask needed.
    inv_c2 = 1.0 / c2_real
    sum_y = jnp.sum(y, axis=-1, keepdims=True)
    sum_y2 = jnp.sum(y * y, axis=-1, keepdims=True)
    mean = sum_y * inv_c2
    var = jnp.maximum(sum_y2 * inv_c2 - mean * mean, 0.0)   # clamp cancellation
    inv_std = lax.rsqrt(var + ln_eps)                       # EUP rsqrt, (TM, 1)
    out = (y - mean) * inv_std * g_ref[...] + beta_ref[...]
    # Padded gamma/beta are zero -> padded output columns are zero (sliced off).

    # Dropout in eval mode == identity.
    o_ref[...] = out.astype(o_ref.dtype)


@functools.partial(jax.jit, static_argnames=("tm",))
def feature_resizer(x, w, b, gamma, beta, *, tm=None):
    """x: [..., C1] -> [..., C2].  w: [C1, C2], b/gamma/beta: [C2]."""
    orig_shape = x.shape
    c1 = orig_shape[-1]
    c2 = w.shape[1]
    x2d = x.reshape(-1, c1)
    n_tok = x2d.shape[0]

    # Lane-dense output: pad C2 up to a multiple of 128 (unmasked vst stores).
    c2_pad = _round_up(c2, _LANE)
    pad_c = c2_pad - c2

    x_bytes = jnp.dtype(x.dtype).itemsize
    w_bytes = jnp.dtype(w.dtype).itemsize
    o_bytes = x_bytes
    min_tile = _min_token_tile(x.dtype)

    budget, vmem_limit = _vmem_params()
    if tm is None:
        tm = _pick_tm(n_tok, c1, c2_pad, x_bytes, w_bytes, o_bytes, min_tile, budget)

    # Pad ONLY the feature axis of the (small, resident) parameters.  The token
    # axis is handled ragged in-grid: grid = cdiv(n_tok, tm) and Pallas masks
    # the writeback of the partial trailing block.
    wp = w if pad_c == 0 else jnp.pad(w, ((0, 0), (0, pad_c)))
    b2 = jnp.pad(b.astype(jnp.float32), (0, pad_c)).reshape(1, c2_pad)
    g2 = jnp.pad(gamma.astype(jnp.float32), (0, pad_c)).reshape(1, c2_pad)
    be2 = jnp.pad(beta.astype(jnp.float32), (0, pad_c)).reshape(1, c2_pad)

    grid = (pl.cdiv(n_tok, tm),)
    kernel = functools.partial(_feature_resizer_kernel, c2_real=c2, ln_eps=LN_EPS)
    out = pl.pallas_call(
        kernel,
        out_shape=jax.ShapeDtypeStruct((n_tok, c2_pad), x.dtype),
        grid_spec=pltpu.PrefetchScalarGridSpec(
            num_scalar_prefetch=0,
            grid=grid,
            in_specs=[
                pl.BlockSpec((tm, c1), lambda i: (i, 0)),       # x tile
                pl.BlockSpec((c1, c2_pad), lambda i: (0, 0)),   # weight (resident)
                pl.BlockSpec((1, c2_pad), lambda i: (0, 0)),    # bias
                pl.BlockSpec((1, c2_pad), lambda i: (0, 0)),    # gamma
                pl.BlockSpec((1, c2_pad), lambda i: (0, 0)),    # beta
            ],
            out_specs=pl.BlockSpec((tm, c2_pad), lambda i: (i, 0)),
        ),
        compiler_params=pltpu.CompilerParams(
            dimension_semantics=("parallel",),
            vmem_limit_bytes=vmem_limit,
        ),
    )(x2d, wp, b2, g2, be2)

    if pad_c:
        out = out[:, :c2]
    return out.reshape(*orig_shape[:-1], c2)


def _reference(x, w, b, gamma, beta):
    y = jnp.einsum("...i,ij->...j",
                   x.astype(jnp.float32), w.astype(jnp.float32)) + b.astype(jnp.float32)
    mean = jnp.mean(y, axis=-1, keepdims=True)
    var = jnp.mean((y - mean) ** 2, axis=-1, keepdims=True)
    yn = (y - mean) / jnp.sqrt(var + LN_EPS)
    return yn * gamma.astype(jnp.float32) + beta.astype(jnp.float32)


if __name__ == "__main__":
    key = jax.random.PRNGKey(0)

    def run_case(batch, seq, c1, c2, k, dtype=jnp.float32, atol=2e-3, rtol=2e-3):
        kx, kw, kb, kg, kbe = jax.random.split(k, 5)
        x = jax.random.normal(kx, (batch, seq, c1), dtype=jnp.float32).astype(dtype)
        # nn.Linear stores weight as [out, in]; we keep it as [in, out] for the kernel.
        w = (jax.random.normal(kw, (c1, c2), dtype=jnp.float32) * 0.05).astype(dtype)
        b = jax.random.normal(kb, (c2,), dtype=jnp.float32) * 0.05
        gamma = 1.0 + 0.01 * jax.random.normal(kg, (c2,), dtype=jnp.float32)
        beta = 0.01 * jax.random.normal(kbe, (c2,), dtype=jnp.float32)

        out = jax.block_until_ready(feature_resizer(x, w, b, gamma, beta))
        ref = _reference(x, w, b, gamma, beta)
        assert out.shape == (batch, seq, c2)
        assert jnp.allclose(out.astype(jnp.float32), ref, atol=atol, rtol=rtol), \
            f"mismatch vs reference for case {(batch, seq, c1, c2, dtype)}"

    k1, k2, k3, k4 = jax.random.split(key, 4)
    # Small shapes consistent with the module: tokens of dim C1 -> dim C2.
    run_case(2, 8, 32, 64, k1)                    # C2 lane padding (64 -> 128)
    run_case(3, 5, 32, 64, k2)                    # ragged token count (15) -> partial block
    run_case(4, 300, 256, 256, k3)                # multi-block grid + partial tail, no C2 pad
    run_case(2, 10, 64, 96, k4, dtype=jnp.bfloat16, atol=5e-2, rtol=5e-2)  # bf16 tile floor

    print("KERNEL_OK")
</pallas_src>

<mosaic_0001>
module attributes {stable_mosaic.version = 11 : i64} {
  func.func @_feature_resizer_kernel(%arg0: i32, %arg1: memref<16x32xf32, #tpu.memory_space<vmem>>, %arg2: memref<32x128xf32, #tpu.memory_space<vmem>>, %arg3: memref<1x128xf32, #tpu.memory_space<vmem>>, %arg4: memref<1x128xf32, #tpu.memory_space<vmem>>, %arg5: memref<1x128xf32, #tpu.memory_space<vmem>>, %arg6: memref<16x128xf32, #tpu.memory_space<vmem>>) attributes {dimension_semantics = [#tpu.dimension_semantics<parallel>], iteration_bounds = array<i64: 1>, scalar_prefetch = 0 : i64, scratch_operands = 0 : i64, tpu.core_type = #tpu.core_type<tc>, window_params = [{transform_indices = @transform_0, window_bounds = array<i64: 16, 32>}, {pipeline_mode = #tpu.pipeline_mode<synchronous>, transform_indices = @transform_1, window_bounds = array<i64: 32, 128>}, {pipeline_mode = #tpu.pipeline_mode<synchronous>, transform_indices = @transform_2, window_bounds = array<i64: 1, 128>}, {pipeline_mode = #tpu.pipeline_mode<synchronous>, transform_indices = @transform_3, window_bounds = array<i64: 1, 128>}, {pipeline_mode = #tpu.pipeline_mode<synchronous>, transform_indices = @transform_4, window_bounds = array<i64: 1, 128>}, {transform_indices = @transform_5, window_bounds = array<i64: 16, 128>}]} {
    %c0 = arith.constant 0 : index
    %c0_0 = arith.constant 0 : index
    %0 = vector.load %arg1[%c0, %c0_0] : memref<16x32xf32, #tpu.memory_space<vmem>>, vector<16x32xf32>
    %c0_1 = arith.constant 0 : index
    %c0_2 = arith.constant 0 : index
    %1 = vector.load %arg2[%c0_1, %c0_2] : memref<32x128xf32, #tpu.memory_space<vmem>>, vector<32x128xf32>
    %cst = arith.constant dense<0.000000e+00> : vector<16x128xf32>
    %2 = tpu.matmul %0, %1, %cst {dimension_numbers = #tpu.dot_dimension_numbers<[1], [0], [0], [1], [0, 0, 1, 1], [], []>} : vector<16x32xf32>, vector<32x128xf32>, vector<16x128xf32> -> vector<16x128xf32>
    %c0_3 = arith.constant 0 : index
    %c0_4 = arith.constant 0 : index
    %3 = vector.load %arg3[%c0_3, %c0_4] : memref<1x128xf32, #tpu.memory_space<vmem>>, vector<1x128xf32>
    %4 = vector.broadcast %3 : vector<1x128xf32> to vector<16x128xf32>
    %5 = arith.addf %2, %4 : vector<16x128xf32>
    %cst_5 = arith.constant dense<0.000000e+00> : vector<16xf32>
    %6 = vector.multi_reduction <add>, %5, %cst_5 [1] : vector<16x128xf32> to vector<16xf32>
    %7 = vector.shape_cast %6 : vector<16xf32> to vector<16x1xf32>
    %8 = arith.mulf %5, %5 : vector<16x128xf32>
    %cst_6 = arith.constant dense<0.000000e+00> : vector<16xf32>
    %9 = vector.multi_reduction <add>, %8, %cst_6 [1] : vector<16x128xf32> to vector<16xf32>
    %10 = vector.shape_cast %9 : vector<16xf32> to vector<16x1xf32>
    %cst_7 = arith.constant 1.562500e-02 : f32
    %11 = vector.broadcast %cst_7 : f32 to vector<16x1xf32>
    %12 = arith.mulf %7, %11 : vector<16x1xf32>
    %cst_8 = arith.constant 1.562500e-02 : f32
    %13 = vector.broadcast %cst_8 : f32 to vector<16x1xf32>
    %14 = arith.mulf %10, %13 : vector<16x1xf32>
    %15 = arith.mulf %12, %12 : vector<16x1xf32>
    %16 = arith.subf %14, %15 : vector<16x1xf32>
    %cst_9 = arith.constant 0.000000e+00 : f32
    %17 = vector.broadcast %cst_9 : f32 to vector<16x1xf32>
    %18 = arith.maximumf %16, %17 : vector<16x1xf32>
    %cst_10 = arith.constant 9.99999996E-13 : f32
    %19 = vector.broadcast %cst_10 : f32 to vector<16x1xf32>
    %20 = arith.addf %18, %19 : vector<16x1xf32>
    %21 = math.rsqrt %20 : vector<16x1xf32>
    %22 = vector.broadcast %12 : vector<16x1xf32> to vector<16x128xf32>
    %23 = arith.subf %5, %22 : vector<16x128xf32>
    %24 = vector.broadcast %21 : vector<16x1xf32> to vector<16x128xf32>
    %25 = arith.mulf %23, %24 : vector<16x128xf32>
    %c0_11 = arith.constant 0 : index
    %c0_12 = arith.constant 0 : index
    %26 = vector.load %arg4[%c0_11, %c0_12] : memref<1x128xf32, #tpu.memory_space<vmem>>, vector<1x128xf32>
    %27 = vector.broadcast %26 : vector<1x128xf32> to vector<16x128xf32>
    %28 = arith.mulf %25, %27 : vector<16x128xf32>
    %c0_13 = arith.constant 0 : index
    %c0_14 = arith.constant 0 : index
    %29 = vector.load %arg5[%c0_13, %c0_14] : memref<1x128xf32, #tpu.memory_space<vmem>>, vector<1x128xf32>
    %30 = vector.broadcast %29 : vector<1x128xf32> to vector<16x128xf32>
    %31 = arith.addf %28, %30 : vector<16x128xf32>
    %c0_15 = arith.constant 0 : index
    %c0_16 = arith.constant 0 : index
    %32 = vector.load %arg6[%c0_15, %c0_16] : memref<16x128xf32, #tpu.memory_space<vmem>>, vector<16x128xf32>
    tpu.vector_store %arg6[%c0_15, %c0_16], %31 {strides = array<i32>} : memref<16x128xf32, #tpu.memory_space<vmem>>, vector<16x128xf32>,
    return
  }
  func.func @transform_0(%arg0: i32) -> (i32, i32) {
    %c0_i32 = arith.constant 0 : i32
    %c0_i32_0 = arith.constant 0 : i32
    return %arg0, %c0_i32 : i32, i32
  }
  func.func @transform_1(%arg0: i32) -> (i32, i32) {
    %c0_i32 = arith.constant 0 : i32
    %c0_i32_0 = arith.constant 0 : i32
    %c0_i32_1 = arith.constant 0 : i32
    return %c0_i32, %c0_i32_0 : i32, i32
  }
  func.func @transform_2(%arg0: i32) -> (i32, i32) {
    %c0_i32 = arith.constant 0 : i32
    %c0_i32_0 = arith.constant 0 : i32
    %c0_i32_1 = arith.constant 0 : i32
    return %c0_i32, %c0_i32_0 : i32, i32
  }
  func.func @transform_3(%arg0: i32) -> (i32, i32) {
    %c0_i32 = arith.constant 0 : i32
    %c0_i32_0 = arith.constant 0 : i32
    %c0_i32_1 = arith.constant 0 : i32
    return %c0_i32, %c0_i32_0 : i32, i32
  }
  func.func @transform_4(%arg0: i32) -> (i32, i32) {
    %c0_i32 = arith.constant 0 : i32
    %c0_i32_0 = arith.constant 0 : i32
    %c0_i32_1 = arith.constant 0 : i32
    return %c0_i32, %c0_i32_0 : i32, i32
  }
  func.func @transform_5(%arg0: i32) -> (i32, i32) {
    %c0_i32 = arith.constant 0 : i32
    %c0_i32_0 = arith.constant 0 : i32
    return %arg0, %c0_i32 : i32, i32
  }
}

</mosaic_0001>

<llo_original>
// kernel: feature_resizer.1
$region0: #{feature_resizer.1}
  #allocation0 [shape = 'u32[]', space=smem, size = 0x4, offset = 0x4, fixed_abs, tag = 'smem constant byte address 0x4 - core index']
  #allocation1 [shape = 'u32[144,128]{1,0:T(1,128)}', space=vmem, size = 0x12000, scoped, tag = 'internal scratch']
  %s0 = inlined_call_operand.vmem [shape: f32[16,32], index: 0, kind: input, shape index: {}]
  %s1 = inlined_call_operand.vmem [shape: f32[32,128], index: 1, kind: input, shape index: {}]
  %s2 = inlined_call_operand.vmem [shape: f32[1,128], index: 2, kind: input, shape index: {}]
  %s3 = inlined_call_operand.vmem [shape: f32[1,128], index: 3, kind: input, shape index: {}]
  %s4 = inlined_call_operand.vmem [shape: f32[1,128], index: 4, kind: input, shape index: {}]
  %s5 = inlined_call_operand.vmem [shape: f32[16,128], index: 5, kind: output, shape index: {}]
  %s6 = sld [smem:[#allocation0]]
  $region30: #{feature_resizer.1} parent=0
    _
  %s8 = ssub.s32 1, %s6
  %s9 = scalar_select 0, %s8, %s6
  // Predicated region
  $region2: #{feature_resizer.1} parent=0 // pred_check
    _
  $region3: #{feature_resizer.1} parent=0 // pred_check_branch
    %11 = sbr.rel (0) target = $region5
  $region4: #{feature_resizer.1} parent=0 // pred_region
    _
  $region5: #{feature_resizer.1} parent=0 // pred_fallthru
    _
  // Predicated region
  $region6: #{feature_resizer.1} parent=0 // pred_check
    _
  $region7: #{feature_resizer.1} parent=0 // pred_check_branch
    %13 = sbr.rel (0) target = $region9
  $region8: #{feature_resizer.1} parent=0 // pred_region
    _
  $region9: #{feature_resizer.1} parent=0 // pred_fallthru
    _
  // Predicated region
  $region10: #{feature_resizer.1} parent=0 // pred_check
    _
  $region11: #{feature_resizer.1} parent=0 // pred_check_branch
    %15 = sbr.rel (0) target = $region13
  $region12: #{feature_resizer.1} parent=0 // pred_region
    _
  $region13: #{feature_resizer.1} parent=0 // pred_fallthru
    _
  // Predicated region
  $region14: #{feature_resizer.1} parent=0 // pred_check
    _
  $region15: #{feature_resizer.1} parent=0 // pred_check_branch
    %17 = sbr.rel (0) target = $region17
  $region16: #{feature_resizer.1} parent=0 // pred_region
    _
  $region17: #{feature_resizer.1} parent=0 // pred_fallthru
    _
  // Predicated region
  $region18: #{feature_resizer.1} parent=0 // pred_check
    _
  $region19: #{feature_resizer.1} parent=0 // pred_check_branch
    %19 = sbr.rel (0) target = $region21
  $region20: #{feature_resizer.1} parent=0 // pred_region
    _
  $region21: #{feature_resizer.1} parent=0 // pred_fallthru
    _
  %v20 = vld [vmem:[%s0] sm:$0xff]
  %v21 = vld [vmem:[%s0 + $0x8] sm:$0xff]
  %v22 = vld [vmem:[%s1] sm:$0xff]
  %v23 = vld [vmem:[%s1 + $0x8] sm:$0xff]
  %v24 = vld [vmem:[%s1 + $0x10] sm:$0xff]
  %v25 = vld [vmem:[%s1 + $0x18] sm:$0xff]
  %v26 = vld [vmem:[%s2] sm:$0x1]
  %v28 = vlaneseq
  %v29 = vshrl.u32 %v28, 7
  %v30 = vsub.s32 0, %v29
  %v31 = vrot.slane %v26, %v30
  %vm33 = vcmask 261120
  %v35 = vsel %vm33, %v20, 0
  %v38 = vsel %vm33, %v21, 0
  %40 = vmatprep.subr.mxu0 0.0
  %41 = vmatpush1.msra.mxu0 %v22
  %42 = vmatprep.subr.mxu0 0.0
  %43 = vmatpush1.msra.mxu0 %v23
  %44 = vmatprep.subr.mxu0 0.0
  %45 = vmatpush1.msra.mxu0 %v24
  %46 = vmatprep.subr.mxu0 0.0
  %47 = vmatpush1.msra.mxu0 %v25
  %48 = vmatprep.subr.mxu0 0.0
  %49 = vmatpush1.msra.mxu0 0.0
  %50 = vmatprep.subr.mxu0 0.0
  %51 = vmatpush1.msra.mxu0 0.0
  %52 = vmatprep.subr.mxu0 0.0
  %53 = vmatpush1.msra.mxu0 0.0
  %54 = vmatprep.subr.mxu0 0.0
  %55 = vmatpush1.msra.mxu0 0.0
  %56 = vmatprep.subr.mxu0 0.0
  %57 = vmatpush1.msra.mxu0 0.0
  %58 = vmatprep.subr.mxu0 0.0
  %59 = vmatpush1.msra.mxu0 0.0
  %60 = vmatprep.subr.mxu0 0.0
  %61 = vmatpush1.msra.mxu0 0.0
  %62 = vmatprep.subr.mxu0 0.0
  %63 = vmatpush1.msra.mxu0 0.0
  %64 = vmatprep.subr.mxu0 0.0
  %65 = vmatpush1.msra.mxu0 0.0
  %66 = vmatprep.subr.mxu0 0.0
  %67 = vmatpush1.msra.mxu0 0.0
  %68 = vmatprep.subr.mxu0 0.0
  %69 = vmatpush1.msra.mxu0 0.0
  %70 = vmatprep.subr.mxu0 0.0
  %71 = vmatpush1.msra.mxu0 0.0
  %72 = vmatprep.subr.mxu0 0.0
  %73 = vmatpush1.msra.mxu0 0.0
  %74 = vmatprep.subr.mxu0 0.0
  %75 = vmatpush1.msra.mxu0 0.0
  %76 = vmatprep.subr.mxu0 0.0
  %77 = vmatpush1.msra.mxu0 0.0
  %78 = vmatprep.subr.mxu0 0.0
  %79 = vmatpush1.msra.mxu0 0.0
  %80 = vmatprep.subr.mxu0 0.0
  %81 = vmatpush1.msra.mxu0 0.0
  %82 = vmatprep.subr.mxu0 0.0
  %83 = vmatpush1.msra.mxu0 0.0
  %84 = vmatprep.subr.mxu0 0.0
  %85 = vmatpush1.msra.mxu0 0.0
  %86 = vmatprep.subr.mxu0 0.0
  %87 = vmatpush1.msra.mxu0 0.0
  %88 = vmatprep.subr.mxu0 0.0
  %89 = vmatpush1.msra.mxu0 0.0
  %90 = vmatprep.subr.mxu0 0.0
  %91 = vmatpush1.msra.mxu0 0.0
  %92 = vmatprep.subr.mxu0 0.0
  %93 = vmatpush1.msra.mxu0 0.0
  %94 = vmatprep.subr.mxu0 0.0
  %95 = vmatpush1.msra.mxu0 0.0
  %96 = vmatprep.subr.mxu0 0.0
  %97 = vmatpush1.msra.mxu0 0.0
  %98 = vmatprep.subr.mxu0 0.0
  %99 = vmatpush1.msra.mxu0 0.0
  %100 = vmatprep.subr.mxu0 0.0
  %101 = vmatpush1.msra.mxu0 0.0
  %102 = vmatprep.subr.mxu0 0.0
  %103 = vmatpush1.msra.mxu0 0.0
  %104 = vmatprep.mubr.f32.mxu0 0.0
  %105 = vmatmul.mubr.f32.gmra.mrb[0].mxu0 %v35
  %v106 = vpop.f32.mrb[0].mxu0
  %v107 = vadd.f32 %v31, %v106
  %v108 = vpop.f32.mrb[0].mxu0
  %109 = vmatprep.mubr.f32.mxu0 0.0
  %110 = vmatmul.mubr.f32.gmra.mrb[0].mxu0 %v38
  %v111 = vpop.f32.mrb[0].mxu0
  %v112 = vadd.f32 %v31, %v111
  %v113 = vpop.f32.mrb[0].mxu0
  %114 = vdwg.mxu0
  %115 = vadd.xlane.f32.xlu0 %v107
  %v116 = vpop.xlane.xlu0 %115
  %117 = vadd.xlane.f32.xlu0 %v112
  %v118 = vpop.xlane.xlu0 %117
  %v119 = vmul.f32 %v107, %v107
  %v120 = vmul.f32 %v112, %v112
  %121 = vadd.xlane.f32.xlu0 %v119
  %v122 = vpop.xlane.xlu0 %121
  %123 = vadd.xlane.f32.xlu0 %v120
  %v124 = vpop.xlane.xlu0 %123
  %v125 = vmul.f32 %v116, 0.015625
  %v126 = vmul.f32 %v118, 0.015625
  %v127 = vmul.f32 %v122, 0.015625
  %v128 = vmul.f32 %v124, 0.015625
  %v129 = vmul.f32 %v125, %v125
  %v130 = vmul.f32 %v126, %v126
  %v131 = vsub.f32 %v127, %v129
  %v132 = vsub.f32 %v128, %v130
  %v133 = vmax.f32 %v131, 0.0
  %v134 = vmax.f32 %v132, 0.0
  %v135 = vadd.f32 %v133, 1e-12
  %v136 = vadd.f32 %v134, 1e-12
  %v137 = vrsqrt.pop %v135
  %v138 = vrsqrt.pop %v136
  %v139 = vsub.f32 %v107, %v125
  %v140 = vsub.f32 %v112, %v126
  %v141 = vmul.f32 %v139, %v137
  %v142 = vmul.f32 %v140, %v138
  %v143 = vld [vmem:[%s3] sm:$0x1]
  %v145 = vlaneseq
  %v146 = vshrl.u32 %v145, 7
  %v147 = vsub.s32 0, %v146
  %v148 = vrot.slane %v143, %v147
  %v150 = vmul.f32 %v141, %v148
  %v151 = vmul.f32 %v142, %v148
  %v152 = vld [vmem:[%s4] sm:$0x1]
  %v154 = vlaneseq
  %v155 = vshrl.u32 %v154, 7
  %v156 = vsub.s32 0, %v155
  %v157 = vrot.slane %v152, %v156
  %v159 = vadd.f32 %v150, %v157
  %v160 = vadd.f32 %v151, %v157
  %161 = vst [vmem:[%s5] sm:$0xff] %v159
  %162 = vst [vmem:[%s5 + $0x8] sm:$0xff] %v160
  // Predicated region
  $region22: #{feature_resizer.1} parent=0 // pred_check
    _
  $region23: #{feature_resizer.1} parent=0 // pred_check_branch
    %164 = sbr.rel (0) target = $region25
  $region24: #{feature_resizer.1} parent=0 // pred_region
    _
  $region25: #{feature_resizer.1} parent=0 // pred_fallthru
    _
  // Predicated region
  $region26: #{feature_resizer.1} parent=0 // pred_check
    _
  $region27: #{feature_resizer.1} parent=0 // pred_check_branch
    %166 = sbr.rel (0) target = $region29
  $region28: #{feature_resizer.1} parent=0 // pred_region
    _
  $region29: #{feature_resizer.1} parent=0 // pred_fallthru
    _

</llo_original>
